<compile_context>
chip_gen: v5e
topology: v5e:2x2
jax: 0.10.0
libtpu: 0.0.40
codegen_flags: <defaults>
</compile_context>

<pallas_src>
import jax
import jax.numpy as jnp
from jax import lax
from jax.experimental import pallas as pl
from jax.experimental.pallas import tpu as pltpu

NEG_SLOPE = 0.2          # torch_geometric GATConv default negative_slope
FP = 128                 # padded lane width for all feature dims
BP = 8                   # padded batch (graph) dim -> one full sublane group
VMEM_LIMIT_BYTES = 32 * 1024 * 1024


# ----------------------------------------------------------------------------
# Kernels
# ----------------------------------------------------------------------------
def _gat_root_layer_kernel(x_ref, adj_ref, bsel_ref, rsel_ref, rsrc_ref,
                           place_ref, w_ref, b_ref, was_ref, wad_ref,
                           h_out_ref, cat_out_ref):
    """One GATConv (heads=1) + root-extend + concat(+relu), one target-row tile.

    x_ref    : (N, C)   bf16  all node features (resident, also attention source)
    adj_ref  : (TM, N)  bf16  adjacency tile (target rows x all sources), self loops included
    bsel_ref : (TM, BP) bf16  node -> graph one-hot (this tile)
    rsel_ref : (BP, N)  bf16  graph -> root-node one-hot
    rsrc_ref : (N, Cr)  bf16  features the root-extend gathers from
    place_ref: (Cr, FP) bf16  0/1 matrix placing root features into lanes [H, H+R)
    w_ref    : (C, FP)  bf16  projection, real columns [0, H), rest zero
    b_ref    : (1, FP)  f32   bias (padded with zeros)
    was/wad  : (1, C)   bf16  folded attention vectors  a_{src,dst} @ W^T
    h_out_ref  : (TM, FP) bf16  conv output (pre-relu, pre-concat)  == "x2"
    cat_out_ref: (TM, FP) bf16  relu([conv | root_extend]) padded to FP lanes
    """
    f32, bf16 = jnp.float32, jnp.bfloat16
    tm = adj_ref.shape[0]
    i = pl.program_id(0)
    row0 = pl.multiple_of(i * tm, tm)

    x = x_ref[...]                                                   # (N, C) bf16
    w = w_ref[...]                                                   # (C, FP) bf16

    # Projection of every source node (attention values); f32 accumulation.
    h_full = jnp.dot(x, w, preferred_element_type=f32)               # (N, FP)

    # Attention logits e[i, j] = leaky_relu(<h_i, a_dst> + <h_j, a_src>) with
    # the att vectors folded into the projection weights (wa = a @ W^T).
    # src scores: one (1,C)x(C,N) contraction -> lane-major (1, N) directly.
    s_src = lax.dot_general(was_ref[...], x, (((1,), (1,)), ((), ())),
                            preferred_element_type=f32)              # (1, N)
    x_tile = x_ref[pl.ds(row0, tm), :]                               # (tm, C) bf16
    s_dst = jnp.sum(x_tile.astype(f32) * wad_ref[...].astype(f32),
                    axis=1, keepdims=True)                           # (tm, 1)

    e = s_dst + s_src                                                # (tm, N) f32
    e = jnp.where(e > 0, e, NEG_SLOPE * e)                           # leaky_relu
    e = jnp.where(adj_ref[...].astype(f32) > 0, e, -1e30)            # mask non-edges (f32)
    e = e - jnp.max(e, axis=1, keepdims=True)                        # safe softmax
    p = jnp.exp(e)
    denom = jnp.sum(p, axis=1, keepdims=True)

    # Unnormalised attention @ values on the MXU (bf16 operands), then
    # normalise with the EUP approximate reciprocal (per-row scale).
    o = jnp.dot(p.astype(bf16), h_full.astype(bf16),
                preferred_element_type=f32)                          # (tm, FP)
    conv = o * pl.reciprocal(denom, approx=True) + b_ref[...]        # (tm, FP) f32
    h_out_ref[...] = conv.astype(bf16)

    # Root-extend: per-graph root row of rsrc, placed into lanes [H, H+R) via a
    # 0/1 placement matrix, then broadcast to the tile's nodes.  conv's lanes
    # >= H are exactly zero, so "concat" == add; one full-width relu + store.
    root_rows = jnp.dot(rsel_ref[...], rsrc_ref[...],
                        preferred_element_type=f32)                  # (BP, Cr)
    placed = jnp.dot(root_rows.astype(bf16), place_ref[...],
                     preferred_element_type=f32)                     # (BP, FP)
    root_tile = jnp.dot(bsel_ref[...], placed.astype(bf16),
                        preferred_element_type=f32)                  # (tm, FP)
    cat_out_ref[...] = jnp.maximum(conv + root_tile, 0.0).astype(bf16)
    # TODO(synk): F.dropout is identity in eval mode; training-mode dropout
    # (pltpu.prng_seed / prng_random_bits) is not implemented.
    # TODO(synk): for large sparse graphs, prefetch a per-(row,col)-tile
    # block-nonzero table and skip all-zero adjacency tiles with pl.when.


def _scatter_mean_kernel(msel_ref, xf_ref, out_ref):
    """scatter_mean over the batch assignment: (BP, N) @ (N, FP)."""
    # Tiny at these sizes; at large N this would be row-tiled with the
    # accumulate-on-output pattern (pl.when(i == 0) init, "arbitrary" axis).
    out_ref[...] = jnp.dot(msel_ref[...], xf_ref[...],
                           preferred_element_type=jnp.float32)


# ----------------------------------------------------------------------------
# Host-side preparation (O(N*B) / O(F^2) only, no O(N^2) helper matrices)
# ----------------------------------------------------------------------------
def prepare_inputs(x, adj, batch, rootindex, params):
    f32, bf16 = jnp.float32, jnp.bfloat16
    N, IN = x.shape
    HID = params["w1"].shape[1]
    OUT = params["w2"].shape[1]
    B = int(rootindex.shape[0])
    C2 = HID + IN
    assert B <= BP and C2 <= FP and OUT + HID <= FP

    # Selector matrices (replace the O(N^2) root-gather matrix of v1).
    bsel = (batch[:, None] == jnp.arange(BP)[None, :]).astype(f32)       # (N, BP)
    rsel = jnp.zeros((BP, N), f32).at[jnp.arange(B), rootindex].set(1.0)  # (BP, N)
    counts = jnp.maximum(jnp.sum(bsel, axis=0, keepdims=True), 1.0)      # (1, BP)
    msel = bsel.T / counts.T                                             # (BP, N)

    # Layer 1: project IN -> FP lanes (real columns [0, HID)), fold att vectors.
    w1, as1, ad1, b1 = params["w1"], params["as1"], params["ad1"], params["b1"]
    w1p = jnp.zeros((IN, FP), f32).at[:, :HID].set(w1)
    b1p = jnp.zeros((1, FP), f32).at[:, :HID].set(b1)
    was1 = as1 @ w1.T                                                    # (1, IN)
    wad1 = ad1 @ w1.T
    place1 = jnp.zeros((IN, FP), f32).at[jnp.arange(IN),
                                         HID + jnp.arange(IN)].set(1.0)

    # Layer 2: input is the padded concat (real lanes [0, HID+IN)).
    w2, as2, ad2, b2 = params["w2"], params["as2"], params["ad2"], params["b2"]
    w2p = jnp.zeros((FP, FP), f32).at[:C2, :OUT].set(w2)
    b2p = jnp.zeros((1, FP), f32).at[:, :OUT].set(b2)
    was2 = jnp.zeros((1, FP), f32).at[:, :C2].set(as2 @ w2.T)
    wad2 = jnp.zeros((1, FP), f32).at[:, :C2].set(ad2 @ w2.T)
    place2 = jnp.zeros((FP, FP), f32).at[jnp.arange(HID),
                                         OUT + jnp.arange(HID)].set(1.0)

    cast = lambda a: a.astype(bf16)
    return {
        "dims": (int(N), B, int(IN), int(HID), int(OUT)),
        "x": cast(x), "adj": cast(adj),
        "bsel": cast(bsel), "rsel": cast(rsel), "msel": cast(msel),
        "w1p": cast(w1p), "b1p": b1p, "was1": cast(was1), "wad1": cast(wad1),
        "place1": cast(place1),
        "w2p": cast(w2p), "b2p": b2p, "was2": cast(was2), "wad2": cast(wad2),
        "place2": cast(place2),
    }


def _layer_cost(N, C, Cr, tm):
    tiles = N // tm
    flops = tiles * (2 * N * C * FP          # projection (recomputed per tile)
                     + 2 * N * C             # folded src scores
                     + 2 * tm * N * FP       # attention @ values
                     + 10 * tm * N           # softmax elementwise
                     + 2 * (BP * N * Cr + BP * Cr * FP + tm * BP * FP))
    transcendentals = N * N + N              # exp + reciprocal
    bytes_accessed = 2 * (N * C + N * N + N * BP + BP * N + N * Cr
                          + Cr * FP + C * FP + 2 * N * FP) + 3 * 4 * FP
    return pl.CostEstimate(flops=int(flops),
                           transcendentals=int(transcendentals),
                           bytes_accessed=int(bytes_accessed))


# ----------------------------------------------------------------------------
# Forward
# ----------------------------------------------------------------------------
def tdgat_forward(prep, tm=16):
    N, B, IN, HID, OUT = prep["dims"]
    assert N % tm == 0
    grid = (N // tm,)

    def full(arr):
        return pl.BlockSpec(arr.shape, lambda i: (0,) * arr.ndim)

    def rowtile(cols):
        return pl.BlockSpec((tm, cols), lambda i: (i, 0))

    def layer(xin, rsrc, place, wp, bp, was, wad):
        return pl.pallas_call(
            _gat_root_layer_kernel,
            grid=grid,
            in_specs=[full(xin), rowtile(N), rowtile(BP), full(prep["rsel"]),
                      full(rsrc), full(place), full(wp), full(bp),
                      full(was), full(wad)],
            out_specs=(pl.BlockSpec((tm, FP), lambda i: (i, 0)),
                       pl.BlockSpec((tm, FP), lambda i: (i, 0))),
            out_shape=(jax.ShapeDtypeStruct((N, FP), jnp.bfloat16),
                       jax.ShapeDtypeStruct((N, FP), jnp.bfloat16)),
            compiler_params=pltpu.CompilerParams(
                dimension_semantics=("parallel",),
                vmem_limit_bytes=VMEM_LIMIT_BYTES),
            cost_estimate=_layer_cost(N, xin.shape[1], rsrc.shape[1], tm),
        )(xin, prep["adj"], prep["bsel"], prep["rsel"],
          rsrc, place, wp, bp, was, wad)

    # conv1 + root-extend(x1) + relu
    h1, xc = layer(prep["x"], prep["x"], prep["place1"],
                   prep["w1p"], prep["b1p"], prep["was1"], prep["wad1"])
    # conv2 + root-extend(x2 = h1) + relu   (second output h2 is unused)
    _h2, xf = layer(xc, h1, prep["place2"],
                    prep["w2p"], prep["b2p"], prep["was2"], prep["wad2"])

    vmem = pl.BlockSpec(memory_space=pltpu.MemorySpace.VMEM)
    out_pad = pl.pallas_call(
        _scatter_mean_kernel,
        out_shape=jax.ShapeDtypeStruct((BP, FP), jnp.float32),
        in_specs=[vmem, vmem],
        out_specs=vmem,
        compiler_params=pltpu.CompilerParams(vmem_limit_bytes=VMEM_LIMIT_BYTES),
    )(prep["msel"], xf)

    return out_pad[:B, :OUT + HID]


# ----------------------------------------------------------------------------
# References
# ----------------------------------------------------------------------------
def _ref_layer_matched(xin, adj, bsel, rsel, rsrc, place, w, b, was, wad):
    """Pure-JAX mirror of the kernel math (same bf16 operand casts)."""
    f32, bf16 = jnp.float32, jnp.bfloat16
    h_full = jnp.dot(xin, w, preferred_element_type=f32)
    s_src = lax.dot_general(was, xin, (((1,), (1,)), ((), ())),
                            preferred_element_type=f32)
    s_dst = jnp.sum(xin.astype(f32) * wad.astype(f32), axis=1, keepdims=True)
    e = s_dst + s_src
    e = jnp.where(e > 0, e, NEG_SLOPE * e)
    e = jnp.where(adj.astype(f32) > 0, e, -1e30)
    e = e - jnp.max(e, axis=1, keepdims=True)
    p = jnp.exp(e)
    denom = jnp.sum(p, axis=1, keepdims=True)
    o = jnp.dot(p.astype(bf16), h_full.astype(bf16), preferred_element_type=f32)
    conv = o / denom + b
    root_rows = jnp.dot(rsel, rsrc, preferred_element_type=f32)
    placed = jnp.dot(root_rows.astype(bf16), place, preferred_element_type=f32)
    root_full = jnp.dot(bsel, placed.astype(bf16), preferred_element_type=f32)
    cat = jnp.maximum(conv + root_full, 0.0)
    return conv.astype(bf16), cat.astype(bf16)


def ref_forward_matched(prep):
    N, B, IN, HID, OUT = prep["dims"]
    h1, xc = _ref_layer_matched(prep["x"], prep["adj"], prep["bsel"],
                                prep["rsel"], prep["x"], prep["place1"],
                                prep["w1p"], prep["b1p"],
                                prep["was1"], prep["wad1"])
    _, xf = _ref_layer_matched(xc, prep["adj"], prep["bsel"], prep["rsel"],
                               h1, prep["place2"], prep["w2p"], prep["b2p"],
                               prep["was2"], prep["wad2"])
    out = jnp.dot(prep["msel"], xf, preferred_element_type=jnp.float32)
    return out[:B, :OUT + HID]


def ref_forward_f32(x, adj, batch, rootindex, params):
    """Plain f32 reference with the original (torch-style) math."""
    def gat(feat, w, a_s, a_d, b):
        h = feat @ w
        e = h @ a_d.T + (h @ a_s.T).T
        e = jnp.where(e > 0, e, NEG_SLOPE * e)
        e = jnp.where(adj > 0, e, -1e30)
        e = e - jnp.max(e, axis=1, keepdims=True)
        p = jnp.exp(e)
        return (p / jnp.sum(p, axis=1, keepdims=True)) @ h + b

    h1 = gat(x, params["w1"], params["as1"], params["ad1"], params["b1"])
    xc = jnp.maximum(jnp.concatenate([h1, x[rootindex[batch]]], axis=1), 0.0)
    h2 = gat(xc, params["w2"], params["as2"], params["ad2"], params["b2"])
    xf = jnp.maximum(jnp.concatenate([h2, h1[rootindex[batch]]], axis=1), 0.0)
    B = int(rootindex.shape[0])
    onehot = (jnp.arange(B)[:, None] == batch[None, :]).astype(jnp.float32)
    m = onehot / jnp.sum(onehot, axis=1, keepdims=True)
    return m @ xf


# ----------------------------------------------------------------------------
if __name__ == "__main__":
    key = jax.random.PRNGKey(0)
    TREES, TREE_N = 4, 8
    N, B = TREES * TREE_N, TREES          # 32 nodes, 4 graphs of 8 nodes
    IN, HID, OUT = 8, 16, 16

    ks = jax.random.split(key, 8)
    x = jax.random.normal(ks[0], (N, IN), jnp.float32)
    batch = jnp.repeat(jnp.arange(B, dtype=jnp.int32), TREE_N)
    rootindex = jnp.arange(B, dtype=jnp.int32) * TREE_N

    # top-down tree edges (parent -> child) within each graph
    src, dst = [], []
    for off in range(0, N, TREE_N):
        for k in range(1, TREE_N):
            src.append(off + (k - 1) // 2)
            dst.append(off + k)
    edge_index = jnp.array([src, dst], jnp.int32)

    # dense adjacency with GATConv self loops: adj[target, source]
    adj = jnp.zeros((N, N), jnp.float32)
    adj = adj.at[edge_index[1], edge_index[0]].set(1.0)
    adj = jnp.minimum(adj + jnp.eye(N, dtype=jnp.float32), 1.0)

    params = {
        "w1": 0.2 * jax.random.normal(ks[1], (IN, HID), jnp.float32),
        "as1": 0.2 * jax.random.normal(ks[2], (1, HID), jnp.float32),
        "ad1": 0.2 * jax.random.normal(ks[3], (1, HID), jnp.float32),
        "b1": jnp.zeros((1, HID), jnp.float32),
        "w2": 0.2 * jax.random.normal(ks[4], (HID + IN, OUT), jnp.float32),
        "as2": 0.2 * jax.random.normal(ks[5], (1, OUT), jnp.float32),
        "ad2": 0.2 * jax.random.normal(ks[6], (1, OUT), jnp.float32),
        "b2": jnp.zeros((1, OUT), jnp.float32),
    }

    prep = prepare_inputs(x, adj, batch, rootindex, params)
    out = jax.block_until_ready(tdgat_forward(prep, tm=16))

    ref_match = ref_forward_matched(prep)                       # same bf16-MXU math
    ref_exact = ref_forward_f32(x, adj, batch, rootindex, params)  # pure f32 math

    assert out.shape == (B, OUT + HID)
    assert bool(jnp.all(jnp.isfinite(out)))
    err_match = float(jnp.max(jnp.abs(out - ref_match)))
    err_exact = float(jnp.max(jnp.abs(out - ref_exact)))
    # Precision-matched check: remaining gap is only the EUP approximate
    # reciprocal and MXU accumulation order.
    assert err_match < 1e-2, err_match
    # Cross-precision sanity check of the bf16-operand choice vs plain f32.
    assert err_exact < 8e-2, err_exact
    print("KERNEL_OK")
</pallas_src>

<mosaic_0001>
module attributes {stable_mosaic.version = 11 : i64} {
  func.func @_gat_root_layer_kernel(%arg0: i32, %arg1: memref<32x8xbf16, #tpu.memory_space<vmem>>, %arg2: memref<16x32xbf16, #tpu.memory_space<vmem>>, %arg3: memref<16x8xbf16, #tpu.memory_space<vmem>>, %arg4: memref<8x32xbf16, #tpu.memory_space<vmem>>, %arg5: memref<32x8xbf16, #tpu.memory_space<vmem>>, %arg6: memref<8x128xbf16, #tpu.memory_space<vmem>>, %arg7: memref<8x128xbf16, #tpu.memory_space<vmem>>, %arg8: memref<1x128xf32, #tpu.memory_space<vmem>>, %arg9: memref<1x8xbf16, #tpu.memory_space<vmem>>, %arg10: memref<1x8xbf16, #tpu.memory_space<vmem>>, %arg11: memref<16x128xbf16, #tpu.memory_space<vmem>>, %arg12: memref<16x128xbf16, #tpu.memory_space<vmem>>) attributes {dimension_semantics = [#tpu.dimension_semantics<parallel>], iteration_bounds = array<i64: 2>, scalar_prefetch = 0 : i64, scratch_operands = 0 : i64, tpu.core_type = #tpu.core_type<tc>, window_params = [{pipeline_mode = #tpu.pipeline_mode<synchronous>, transform_indices = @transform_0, window_bounds = array<i64: 32, 8>}, {transform_indices = @transform_1, window_bounds = array<i64: 16, 32>}, {transform_indices = @transform_2, window_bounds = array<i64: 16, 8>}, {pipeline_mode = #tpu.pipeline_mode<synchronous>, transform_indices = @transform_3, window_bounds = array<i64: 8, 32>}, {pipeline_mode = #tpu.pipeline_mode<synchronous>, transform_indices = @transform_4, window_bounds = array<i64: 32, 8>}, {pipeline_mode = #tpu.pipeline_mode<synchronous>, transform_indices = @transform_5, window_bounds = array<i64: 8, 128>}, {pipeline_mode = #tpu.pipeline_mode<synchronous>, transform_indices = @transform_6, window_bounds = array<i64: 8, 128>}, {pipeline_mode = #tpu.pipeline_mode<synchronous>, transform_indices = @transform_7, window_bounds = array<i64: 1, 128>}, {pipeline_mode = #tpu.pipeline_mode<synchronous>, transform_indices = @transform_8, window_bounds = array<i64: 1, 8>}, {pipeline_mode = #tpu.pipeline_mode<synchronous>, transform_indices = @transform_9, window_bounds = array<i64: 1, 8>}, {transform_indices = @transform_10, window_bounds = array<i64: 16, 128>}, {transform_indices = @transform_11, window_bounds = array<i64: 16, 128>}]} {
    %c16_i32 = arith.constant 16 : i32
    %0 = arith.muli %arg0, %c16_i32 : i32
    %1 = tpu.assume_multiple %0, 16 : i32
    %c0 = arith.constant 0 : index
    %c0_0 = arith.constant 0 : index
    %2 = vector.load %arg1[%c0, %c0_0] : memref<32x8xbf16, #tpu.memory_space<vmem>>, vector<32x8xbf16>
    %c0_1 = arith.constant 0 : index
    %c0_2 = arith.constant 0 : index
    %3 = vector.load %arg7[%c0_1, %c0_2] : memref<8x128xbf16, #tpu.memory_space<vmem>>, vector<8x128xbf16>
    %cst = arith.constant dense<0.000000e+00> : vector<32x128xf32>
    %4 = tpu.matmul %2, %3, %cst {dimension_numbers = #tpu.dot_dimension_numbers<[1], [0], [0], [1], [0, 0, 1, 1], [], []>} : vector<32x8xbf16>, vector<8x128xbf16>, vector<32x128xf32> -> vector<32x128xf32>
    %c0_3 = arith.constant 0 : index
    %c0_4 = arith.constant 0 : index
    %5 = vector.load %arg9[%c0_3, %c0_4] : memref<1x8xbf16, #tpu.memory_space<vmem>>, vector<1x8xbf16>
    %cst_5 = arith.constant dense<0.000000e+00> : vector<1x32xf32>
    %6 = tpu.matmul %5, %2, %cst_5 {dimension_numbers = #tpu.dot_dimension_numbers<[1], [1], [0], [0], [0, 0, 1, 0], [], []>} : vector<1x8xbf16>, vector<32x8xbf16>, vector<1x32xf32> -> vector<1x32xf32>
    %7 = arith.index_cast %1 : i32 to index
    %c0_6 = arith.constant 0 : index
    %8 = vector.load %arg1[%7, %c0_6] : memref<32x8xbf16, #tpu.memory_space<vmem>>, vector<16x8xbf16>
    %9 = arith.extf %8 : vector<16x8xbf16> to vector<16x8xf32>
    %c0_7 = arith.constant 0 : index
    %c0_8 = arith.constant 0 : index
    %10 = vector.load %arg10[%c0_7, %c0_8] : memref<1x8xbf16, #tpu.memory_space<vmem>>, vector<1x8xbf16>
    %11 = arith.extf %10 : vector<1x8xbf16> to vector<1x8xf32>
    %12 = vector.broadcast %11 : vector<1x8xf32> to vector<16x8xf32>
    %13 = arith.mulf %9, %12 : vector<16x8xf32>
    %cst_9 = arith.constant dense<0.000000e+00> : vector<16xf32>
    %14 = vector.multi_reduction <add>, %13, %cst_9 [1] : vector<16x8xf32> to vector<16xf32>
    %15 = vector.shape_cast %14 : vector<16xf32> to vector<16x1xf32>
    %16 = vector.broadcast %15 : vector<16x1xf32> to vector<16x32xf32>
    %17 = vector.broadcast %6 : vector<1x32xf32> to vector<16x32xf32>
    %18 = arith.addf %16, %17 : vector<16x32xf32>
    %cst_10 = arith.constant 0.000000e+00 : f32
    %19 = vector.broadcast %cst_10 : f32 to vector<16x32xf32>
    %20 = arith.cmpf ogt, %18, %19 : vector<16x32xf32>
    %cst_11 = arith.constant 2.000000e-01 : f32
    %21 = vector.broadcast %cst_11 : f32 to vector<16x32xf32>
    %22 = arith.mulf %21, %18 : vector<16x32xf32>
    %23 = arith.select %20, %18, %22 : vector<16x32xi1>, vector<16x32xf32>
    %c0_12 = arith.constant 0 : index
    %c0_13 = arith.constant 0 : index
    %24 = vector.load %arg2[%c0_12, %c0_13] : memref<16x32xbf16, #tpu.memory_space<vmem>>, vector<16x32xbf16>
    %25 = arith.extf %24 : vector<16x32xbf16> to vector<16x32xf32>
    %cst_14 = arith.constant 0.000000e+00 : f32
    %26 = vector.broadcast %cst_14 : f32 to vector<16x32xf32>
    %27 = arith.cmpf ogt, %25, %26 : vector<16x32xf32>
    %cst_15 = arith.constant -1.000000e+30 : f32
    %28 = vector.broadcast %cst_15 : f32 to vector<16x32xf32>
    %29 = arith.select %27, %23, %28 : vector<16x32xi1>, vector<16x32xf32>
    %cst_16 = arith.constant dense<0xFF800000> : vector<16xf32>
    %30 = vector.multi_reduction <maximumf>, %29, %cst_16 [1] : vector<16x32xf32> to vector<16xf32>
    %31 = vector.shape_cast %30 : vector<16xf32> to vector<16x1xf32>
    %32 = vector.broadcast %31 : vector<16x1xf32> to vector<16x32xf32>
    %33 = arith.subf %29, %32 : vector<16x32xf32>
    %34 = math.exp %33 : vector<16x32xf32>
    %cst_17 = arith.constant dense<0.000000e+00> : vector<16xf32>
    %35 = vector.multi_reduction <add>, %34, %cst_17 [1] : vector<16x32xf32> to vector<16xf32>
    %36 = vector.shape_cast %35 : vector<16xf32> to vector<16x1xf32>
    %37 = arith.truncf %34 : vector<16x32xf32> to vector<16x32xbf16>
    %38 = arith.truncf %4 : vector<32x128xf32> to vector<32x128xbf16>
    %cst_18 = arith.constant dense<0.000000e+00> : vector<16x128xf32>
    %39 = tpu.matmul %37, %38, %cst_18 {dimension_numbers = #tpu.dot_dimension_numbers<[1], [0], [0], [1], [0, 0, 1, 1], [], []>} : vector<16x32xbf16>, vector<32x128xbf16>, vector<16x128xf32> -> vector<16x128xf32>
    %40 = tpu.reciprocal %36 {approx = true} : vector<16x1xf32> -> vector<16x1xf32>
    %41 = vector.broadcast %40 : vector<16x1xf32> to vector<16x128xf32>
    %42 = arith.mulf %39, %41 : vector<16x128xf32>
    %c0_19 = arith.constant 0 : index
    %c0_20 = arith.constant 0 : index
    %43 = vector.load %arg8[%c0_19, %c0_20] : memref<1x128xf32, #tpu.memory_space<vmem>>, vector<1x128xf32>
    %44 = vector.broadcast %43 : vector<1x128xf32> to vector<16x128xf32>
    %45 = arith.addf %42, %44 : vector<16x128xf32>
    %46 = arith.truncf %45 : vector<16x128xf32> to vector<16x128xbf16>
    %c0_21 = arith.constant 0 : index
    %c0_22 = arith.constant 0 : index
    %47 = vector.load %arg11[%c0_21, %c0_22] : memref<16x128xbf16, #tpu.memory_space<vmem>>, vector<16x128xbf16>
    tpu.vector_store %arg11[%c0_21, %c0_22], %46 {strides = array<i32>} : memref<16x128xbf16, #tpu.memory_space<vmem>>, vector<16x128xbf16>,
    %c0_23 = arith.constant 0 : index
    %c0_24 = arith.constant 0 : index
    %48 = vector.load %arg4[%c0_23, %c0_24] : memref<8x32xbf16, #tpu.memory_space<vmem>>, vector<8x32xbf16>
    %c0_25 = arith.constant 0 : index
    %c0_26 = arith.constant 0 : index
    %49 = vector.load %arg5[%c0_25, %c0_26] : memref<32x8xbf16, #tpu.memory_space<vmem>>, vector<32x8xbf16>
    %cst_27 = arith.constant dense<0.000000e+00> : vector<8x8xf32>
    %50 = tpu.matmul %48, %49, %cst_27 {dimension_numbers = #tpu.dot_dimension_numbers<[1], [0], [0], [1], [0, 0, 1, 1], [], []>} : vector<8x32xbf16>, vector<32x8xbf16>, vector<8x8xf32> -> vector<8x8xf32>
    %51 = arith.truncf %50 : vector<8x8xf32> to vector<8x8xbf16>
    %c0_28 = arith.constant 0 : index
    %c0_29 = arith.constant 0 : index
    %52 = vector.load %arg6[%c0_28, %c0_29] : memref<8x128xbf16, #tpu.memory_space<vmem>>, vector<8x128xbf16>
    %cst_30 = arith.constant dense<0.000000e+00> : vector<8x128xf32>
    %53 = tpu.matmul %51, %52, %cst_30 {dimension_numbers = #tpu.dot_dimension_numbers<[1], [0], [0], [1], [0, 0, 1, 1], [], []>} : vector<8x8xbf16>, vector<8x128xbf16>, vector<8x128xf32> -> vector<8x128xf32>
    %c0_31 = arith.constant 0 : index
    %c0_32 = arith.constant 0 : index
    %54 = vector.load %arg3[%c0_31, %c0_32] : memref<16x8xbf16, #tpu.memory_space<vmem>>, vector<16x8xbf16>
    %55 = arith.truncf %53 : vector<8x128xf32> to vector<8x128xbf16>
    %cst_33 = arith.constant dense<0.000000e+00> : vector<16x128xf32>
    %56 = tpu.matmul %54, %55, %cst_33 {dimension_numbers = #tpu.dot_dimension_numbers<[1], [0], [0], [1], [0, 0, 1, 1], [], []>} : vector<16x8xbf16>, vector<8x128xbf16>, vector<16x128xf32> -> vector<16x128xf32>
    %57 = arith.addf %45, %56 : vector<16x128xf32>
    %cst_34 = arith.constant 0.000000e+00 : f32
    %58 = vector.broadcast %cst_34 : f32 to vector<16x128xf32>
    %59 = arith.maximumf %57, %58 : vector<16x128xf32>
    %60 = arith.truncf %59 : vector<16x128xf32> to vector<16x128xbf16>
    %c0_35 = arith.constant 0 : index
    %c0_36 = arith.constant 0 : index
    %61 = vector.load %arg12[%c0_35, %c0_36] : memref<16x128xbf16, #tpu.memory_space<vmem>>, vector<16x128xbf16>
    tpu.vector_store %arg12[%c0_35, %c0_36], %60 {strides = array<i32>} : memref<16x128xbf16, #tpu.memory_space<vmem>>, vector<16x128xbf16>,
    return
  }
  func.func @transform_0(%arg0: i32) -> (i32, i32) {
    %c0_i32 = arith.constant 0 : i32
    %c0_i32_0 = arith.constant 0 : i32
    %c0_i32_1 = arith.constant 0 : i32
    return %c0_i32, %c0_i32_0 : i32, i32
  }
  func.func @transform_1(%arg0: i32) -> (i32, i32) {
    %c0_i32 = arith.constant 0 : i32
    %c0_i32_0 = arith.constant 0 : i32
    return %arg0, %c0_i32 : i32, i32
  }
  func.func @transform_2(%arg0: i32) -> (i32, i32) {
    %c0_i32 = arith.constant 0 : i32
    %c0_i32_0 = arith.constant 0 : i32
    return %arg0, %c0_i32 : i32, i32
  }
  func.func @transform_3(%arg0: i32) -> (i32, i32) {
    %c0_i32 = arith.constant 0 : i32
    %c0_i32_0 = arith.constant 0 : i32
    %c0_i32_1 = arith.constant 0 : i32
    return %c0_i32, %c0_i32_0 : i32, i32
  }
  func.func @transform_4(%arg0: i32) -> (i32, i32) {
    %c0_i32 = arith.constant 0 : i32
    %c0_i32_0 = arith.constant 0 : i32
    %c0_i32_1 = arith.constant 0 : i32
    return %c0_i32, %c0_i32_0 : i32, i32
  }
  func.func @transform_5(%arg0: i32) -> (i32, i32) {
    %c0_i32 = arith.constant 0 : i32
    %c0_i32_0 = arith.constant 0 : i32
    %c0_i32_1 = arith.constant 0 : i32
    return %c0_i32, %c0_i32_0 : i32, i32
  }
  func.func @transform_6(%arg0: i32) -> (i32, i32) {
    %c0_i32 = arith.constant 0 : i32
    %c0_i32_0 = arith.constant 0 : i32
    %c0_i32_1 = arith.constant 0 : i32
    return %c0_i32, %c0_i32_0 : i32, i32
  }
  func.func @transform_7(%arg0: i32) -> (i32, i32) {
    %c0_i32 = arith.constant 0 : i32
    %c0_i32_0 = arith.constant 0 : i32
    %c0_i32_1 = arith.constant 0 : i32
    return %c0_i32, %c0_i32_0 : i32, i32
  }
  func.func @transform_8(%arg0: i32) -> (i32, i32) {
    %c0_i32 = arith.constant 0 : i32
    %c0_i32_0 = arith.constant 0 : i32
    %c0_i32_1 = arith.constant 0 : i32
    return %c0_i32, %c0_i32_0 : i32, i32
  }
  func.func @transform_9(%arg0: i32) -> (i32, i32) {
    %c0_i32 = arith.constant 0 : i32
    %c0_i32_0 = arith.constant 0 : i32
    %c0_i32_1 = arith.constant 0 : i32
    return %c0_i32, %c0_i32_0 : i32, i32
  }
  func.func @transform_10(%arg0: i32) -> (i32, i32) {
    %c0_i32 = arith.constant 0 : i32
    %c0_i32_0 = arith.constant 0 : i32
    return %arg0, %c0_i32 : i32, i32
  }
  func.func @transform_11(%arg0: i32) -> (i32, i32) {
    %c0_i32 = arith.constant 0 : i32
    %c0_i32_0 = arith.constant 0 : i32
    return %arg0, %c0_i32 : i32, i32
  }
}

</mosaic_0001>

<llo_original>
// kernel: tpu_custom_call.1
$region0: #{tpu_custom_call.1}
  #allocation0 [shape = 'u32[]', space=smem, size = 0x4, offset = 0x4, fixed_abs, tag = 'smem constant byte address 0x4 - core index']
  #allocation1 [shape = 'u32[72,128]{1,0:T(1,128)}', space=vmem, size = 0x9000, scoped, tag = 'internal scratch']
  %s0 = inlined_call_operand.vmem [shape: bf16[32,8], index: 0, kind: input, shape index: {}]
  %s1 = inlined_call_operand.vmem [shape: bf16[32,32], index: 1, kind: input, shape index: {}]
  %s2 = inlined_call_operand.vmem [shape: bf16[32,8], index: 2, kind: input, shape index: {}]
  %s3 = inlined_call_operand.vmem [shape: bf16[8,32], index: 3, kind: input, shape index: {}]
  %s4 = inlined_call_operand.vmem [shape: bf16[32,8], index: 4, kind: input, shape index: {}]
  %s5 = inlined_call_operand.vmem [shape: bf16[8,128], index: 5, kind: input, shape index: {}]
  %s6 = inlined_call_operand.vmem [shape: bf16[8,128], index: 6, kind: input, shape index: {}]
  %s7 = inlined_call_operand.vmem [shape: f32[1,128], index: 7, kind: input, shape index: {}]
  %s8 = inlined_call_operand.vmem [shape: bf16[1,8], index: 8, kind: input, shape index: {}]
  %s9 = inlined_call_operand.vmem [shape: bf16[1,8], index: 9, kind: input, shape index: {}]
  %s10 = inlined_call_operand.hbm [shape: bf16[32,128], index: 10, kind: output, shape index: {0}]
  %s11 = inlined_call_operand.hbm [shape: bf16[32,128], index: 11, kind: output, shape index: {1}]
  %12 = xla_tuple %s10, %s11
  %s13 = sld [smem:[#allocation0]]
  $region81: #{tpu_custom_call.1} parent=0
    _
  %s15 = ssub.s32 1, %s13
  %s16 = scalar_select 0, %s15, %s13
  $region1: #{tpu_custom_call.1} parent=0
    #allocation2 [shape = 'u8[8192]{0}', space=vmem, size = 0x2000, scoped, tag = 'output window, operand 0']
    #allocation3 [shape = 's32[2]{0}', space=sflag, size = 0x8, scoped, tag = 'scoped memory for tpu_custom_call.1']
    #allocation4 [shape = 'u8[8192]{0}', space=vmem, size = 0x2000, scoped, tag = 'output window, operand 1']
    #allocation5 [shape = 's32[2]{0}', space=sflag, size = 0x8, scoped, tag = 'scoped memory for tpu_custom_call.1']
    %17 = vsyncpa [#allocation3], 0
    %s18 = scalar_lea.sflag [#allocation3], 1
    %19 = vsyncpa %s18, 0
    %20 = vsyncpa [#allocation5], 0
    %s21 = scalar_lea.sflag [#allocation5], 1
    %22 = vsyncpa %s21, 0
    loop: start=0, step=1, limit=4
    $region2: #{tpu_custom_call.1} parent=1 // loop_pre_header
      _
    $region3: #{tpu_custom_call.1} parent=1 // loop_header
      %s24 = sphi 0, %s28
      %p25 = scmp.ge.s32.totalorder %s24, 4
      %s32 = sphi 0, %s32
      %s34 = sphi 0, %s32
      %s35 = sphi 0, %s34
      %s49 = sphi 0, %s35
      %s55 = sphi 0, %s57
      %s58 = sphi 0, %s55
      %s59 = sphi 0, %s58
      %s75 = sphi 0, %s59
      %s81 = sphi 0, %s83
      %s84 = sphi 0, %s81
      %s85 = sphi 0, %s84
      %s101 = sphi 0, %s85
      %s105 = sphi 0, %s105
      %s107 = sphi 0, %s105
      %s108 = sphi 0, %s107
      %s122 = sphi 0, %s108
      %s126 = sphi 0, %s126
      %s128 = sphi 0, %s126
      %s129 = sphi 0, %s128
      %s143 = sphi 0, %s129
      %s147 = sphi 0, %s147
      %s149 = sphi 0, %s147
      %s150 = sphi 0, %s149
      %s164 = sphi 0, %s150
      %s168 = sphi 0, %s168
      %s170 = sphi 0, %s168
      %s171 = sphi 0, %s170
      %s185 = sphi 0, %s171
      %s189 = sphi 0, %s189
      %s191 = sphi 0, %s189
      %s192 = sphi 0, %s191
      %s206 = sphi 0, %s192
      %s210 = sphi 0, %s210
      %s212 = sphi 0, %s210
      %s213 = sphi 0, %s212
      %s227 = sphi 0, %s213
      %s231 = sphi 0, %s231
      %s233 = sphi 0, %s231
      %s234 = sphi 0, %s233
      %s248 = sphi 0, %s234
      %s254 = sphi 0, %s256
      %s257 = sphi 0, %s254
      %s258 = sphi 0, %s257
      %s274 = sphi 0, %s258
      %s280 = sphi 0, %s282
      %s283 = sphi 0, %s280
      %s284 = sphi 0, %s283
      %s300 = sphi 0, %s284
    $region4: #{tpu_custom_call.1} parent=1 // loop_header_branch
      %27 = sbr.rel (%p25) target = $region8
    $region5: #{tpu_custom_call.1} parent=1 // loop_body
      %s29 = ssub.s32 %s24, 1
      %s30 = ssub.s32 %s24, 2
      %s31 = sadd.s32 %s24, 1
      %s33 = sadd.s32 %s32, 1
      %p36 = scmp.eq.s32.totalorder %s24, 1
      %p37 = scmp.ne.s32.totalorder %s32, %s34
      %p38 = scmp.eq.s32.totalorder %s24, 0
      %p39 = por %p37, %p38
      %p40 = scmp.ne.s32.totalorder %s32, %s34
      %p41 = scmp.eq.s32.totalorder %s29, 1
      %p42 = por %p40, %p41
      %p43 = scmp.ne.s32.totalorder %s34, %s35
      %p44 = scmp.eq.s32.totalorder %s29, 0
      %p45 = por %p43, %p44
      %p46 = scmp.ne.s32.totalorder %s34, %s35
      %p47 = scmp.eq.s32.totalorder %s30, 1
      %p48 = por %p46, %p47
      %p50 = scmp.ne.s32.totalorder %s35, %s49
      %p51 = scmp.eq.s32.totalorder %s30, 0
      %p52 = por %p50, %p51
      %s53 = ssub.s32 %s24, %s31
      %p54 = scmp.eq.s32.totalorder %s53, 0
      %s56 = sadd.s32 %s55, 1
      %s57 = scalar_select %p54, %s55, %s56
      %p60 = pneg %p54
      %p61 = scmp.eq.s32.totalorder %s24, 1
      %p62 = por %p60, %p61
      %p63 = scmp.ne.s32.totalorder %s55, %s58
      %p64 = scmp.eq.s32.totalorder %s24, 0
      %p65 = por %p63, %p64
      %p66 = scmp.ne.s32.totalorder %s55, %s58
      %p67 = scmp.eq.s32.totalorder %s29, 1
      %p68 = por %p66, %p67
      %p69 = scmp.ne.s32.totalorder %s58, %s59
      %p70 = scmp.eq.s32.totalorder %s29, 0
      %p71 = por %p69, %p70
      %p72 = scmp.ne.s32.totalorder %s58, %s59
      %p73 = scmp.eq.s32.totalorder %s30, 1
      %p74 = por %p72, %p73
      %p76 = scmp.ne.s32.totalorder %s59, %s75
      %p77 = scmp.eq.s32.totalorder %s30, 0
      %p78 = por %p76, %p77
      %s79 = ssub.s32 %s24, %s31
      %p80 = scmp.eq.s32.totalorder %s79, 0
      %s82 = sadd.s32 %s81, 1
      %s83 = scalar_select %p80, %s81, %s82
      %p86 = pneg %p80
      %p87 = scmp.eq.s32.totalorder %s24, 1
      %p88 = por %p86, %p87
      %p89 = scmp.ne.s32.totalorder %s81, %s84
      %p90 = scmp.eq.s32.totalorder %s24, 0
      %p91 = por %p89, %p90
      %p92 = scmp.ne.s32.totalorder %s81, %s84
      %p93 = scmp.eq.s32.totalorder %s29, 1
      %p94 = por %p92, %p93
      %p95 = scmp.ne.s32.totalorder %s84, %s85
      %p96 = scmp.eq.s32.totalorder %s29, 0
      %p97 = por %p95, %p96
      %p98 = scmp.ne.s32.totalorder %s84, %s85
      %p99 = scmp.eq.s32.totalorder %s30, 1
      %p100 = por %p98, %p99
      %p102 = scmp.ne.s32.totalorder %s85, %s101
      %p103 = scmp.eq.s32.totalorder %s30, 0
      %p104 = por %p102, %p103
      %s106 = sadd.s32 %s105, 1
      %p109 = scmp.eq.s32.totalorder %s24, 1
      %p110 = scmp.ne.s32.totalorder %s105, %s107
      %p111 = scmp.eq.s32.totalorder %s24, 0
      %p112 = por %p110, %p111
      %p113 = scmp.ne.s32.totalorder %s105, %s107
      %p114 = scmp.eq.s32.totalorder %s29, 1
      %p115 = por %p113, %p114
      %p116 = scmp.ne.s32.totalorder %s107, %s108
      %p117 = scmp.eq.s32.totalorder %s29, 0
      %p118 = por %p116, %p117
      %p119 = scmp.ne.s32.totalorder %s107, %s108
      %p120 = scmp.eq.s32.totalorder %s30, 1
      %p121 = por %p119, %p120
      %p123 = scmp.ne.s32.totalorder %s108, %s122
      %p124 = scmp.eq.s32.totalorder %s30, 0
      %p125 = por %p123, %p124
      %s127 = sadd.s32 %s126, 1
      %p130 = scmp.eq.s32.totalorder %s24, 1
      %p131 = scmp.ne.s32.totalorder %s126, %s128
      %p132 = scmp.eq.s32.totalorder %s24, 0
      %p133 = por %p131, %p132
      %p134 = scmp.ne.s32.totalorder %s126, %s128
      %p135 = scmp.eq.s32.totalorder %s29, 1
      %p136 = por %p134, %p135
      %p137 = scmp.ne.s32.totalorder %s128, %s129
      %p138 = scmp.eq.s32.totalorder %s29, 0
      %p139 = por %p137, %p138
      %p140 = scmp.ne.s32.totalorder %s128, %s129
      %p141 = scmp.eq.s32.totalorder %s30, 1
      %p142 = por %p140, %p141
      %p144 = scmp.ne.s32.totalorder %s129, %s143
      %p145 = scmp.eq.s32.totalorder %s30, 0
      %p146 = por %p144, %p145
      %s148 = sadd.s32 %s147, 1
      %p151 = scmp.eq.s32.totalorder %s24, 1
      %p152 = scmp.ne.s32.totalorder %s147, %s149
      %p153 = scmp.eq.s32.totalorder %s24, 0
      %p154 = por %p152, %p153
      %p155 = scmp.ne.s32.totalorder %s147, %s149
      %p156 = scmp.eq.s32.totalorder %s29, 1
      %p157 = por %p155, %p156
      %p158 = scmp.ne.s32.totalorder %s149, %s150
      %p159 = scmp.eq.s32.totalorder %s29, 0
      %p160 = por %p158, %p159
      %p161 = scmp.ne.s32.totalorder %s149, %s150
      %p162 = scmp.eq.s32.totalorder %s30, 1
      %p163 = por %p161, %p162
      %p165 = scmp.ne.s32.totalorder %s150, %s164
      %p166 = scmp.eq.s32.totalorder %s30, 0
      %p167 = por %p165, %p166
      %s169 = sadd.s32 %s168, 1
      %p172 = scmp.eq.s32.totalorder %s24, 1
      %p173 = scmp.ne.s32.totalorder %s168, %s170
      %p174 = scmp.eq.s32.totalorder %s24, 0
      %p175 = por %p173, %p174
      %p176 = scmp.ne.s32.totalorder %s168, %s170
      %p177 = scmp.eq.s32.totalorder %s29, 1
      %p178 = por %p176, %p177
      %p179 = scmp.ne.s32.totalorder %s170, %s171
      %p180 = scmp.eq.s32.totalorder %s29, 0
      %p181 = por %p179, %p180
      %p182 = scmp.ne.s32.totalorder %s170, %s171
      %p183 = scmp.eq.s32.totalorder %s30, 1
      %p184 = por %p182, %p183
      %p186 = scmp.ne.s32.totalorder %s171, %s185
      %p187 = scmp.eq.s32.totalorder %s30, 0
      %p188 = por %p186, %p187
      %s190 = sadd.s32 %s189, 1
      %p193 = scmp.eq.s32.totalorder %s24, 1
      %p194 = scmp.ne.s32.totalorder %s189, %s191
      %p195 = scmp.eq.s32.totalorder %s24, 0
      %p196 = por %p194, %p195
      %p197 = scmp.ne.s32.totalorder %s189, %s191
      %p198 = scmp.eq.s32.totalorder %s29, 1
      %p199 = por %p197, %p198
      %p200 = scmp.ne.s32.totalorder %s191, %s192
      %p201 = scmp.eq.s32.totalorder %s29, 0
      %p202 = por %p200, %p201
      %p203 = scmp.ne.s32.totalorder %s191, %s192
      %p204 = scmp.eq.s32.totalorder %s30, 1
      %p205 = por %p203, %p204
      %p207 = scmp.ne.s32.totalorder %s192, %s206
      %p208 = scmp.eq.s32.totalorder %s30, 0
      %p209 = por %p207, %p208
      %s211 = sadd.s32 %s210, 1
      %p214 = scmp.eq.s32.totalorder %s24, 1
      %p215 = scmp.ne.s32.totalorder %s210, %s212
      %p216 = scmp.eq.s32.totalorder %s24, 0
      %p217 = por %p215, %p216
      %p218 = scmp.ne.s32.totalorder %s210, %s212
      %p219 = scmp.eq.s32.totalorder %s29, 1
      %p220 = por %p218, %p219
      %p221 = scmp.ne.s32.totalorder %s212, %s213
      %p222 = scmp.eq.s32.totalorder %s29, 0
      %p223 = por %p221, %p222
      %p224 = scmp.ne.s32.totalorder %s212, %s213
      %p225 = scmp.eq.s32.totalorder %s30, 1
      %p226 = por %p224, %p225
      %p228 = scmp.ne.s32.totalorder %s213, %s227
      %p229 = scmp.eq.s32.totalorder %s30, 0
      %p230 = por %p228, %p229
      %s232 = sadd.s32 %s231, 1
      %p235 = scmp.eq.s32.totalorder %s24, 1
      %p236 = scmp.ne.s32.totalorder %s231, %s233
      %p237 = scmp.eq.s32.totalorder %s24, 0
      %p238 = por %p236, %p237
      %p239 = scmp.ne.s32.totalorder %s231, %s233
      %p240 = scmp.eq.s32.totalorder %s29, 1
      %p241 = por %p239, %p240
      %p242 = scmp.ne.s32.totalorder %s233, %s234
      %p243 = scmp.eq.s32.totalorder %s29, 0
      %p244 = por %p242, %p243
      %p245 = scmp.ne.s32.totalorder %s233, %s234
      %p246 = scmp.eq.s32.totalorder %s30, 1
      %p247 = por %p245, %p246
      %p249 = scmp.ne.s32.totalorder %s234, %s248
      %p250 = scmp.eq.s32.totalorder %s30, 0
      %p251 = por %p249, %p250
      %s252 = ssub.s32 %s24, %s31
      %p253 = scmp.eq.s32.totalorder %s252, 0
      %s255 = sadd.s32 %s254, 1
      %s256 = scalar_select %p253, %s254, %s255
      %p259 = pneg %p253
      %p260 = scmp.eq.s32.totalorder %s24, 1
      %p261 = por %p259, %p260
      %p262 = scmp.ne.s32.totalorder %s254, %s257
      %p263 = scmp.eq.s32.totalorder %s24, 0
      %p264 = por %p262, %p263
      %p265 = scmp.ne.s32.totalorder %s254, %s257
      %p266 = scmp.eq.s32.totalorder %s29, 1
      %p267 = por %p265, %p266
      %p268 = scmp.ne.s32.totalorder %s257, %s258
      %p269 = scmp.eq.s32.totalorder %s29, 0
      %p270 = por %p268, %p269
      %p271 = scmp.ne.s32.totalorder %s257, %s258
      %p272 = scmp.eq.s32.totalorder %s30, 1
      %p273 = por %p271, %p272
      %p275 = scmp.ne.s32.totalorder %s258, %s274
      %p276 = scmp.eq.s32.totalorder %s30, 0
      %p277 = por %p275, %p276
      %s278 = ssub.s32 %s24, %s31
      %p279 = scmp.eq.s32.totalorder %s278, 0
      %s281 = sadd.s32 %s280, 1
      %s282 = scalar_select %p279, %s280, %s281
      %p285 = pneg %p279
      %p286 = scmp.eq.s32.totalorder %s24, 1
      %p287 = por %p285, %p286
      %p288 = scmp.ne.s32.totalorder %s280, %s283
      %p289 = scmp.eq.s32.totalorder %s24, 0
      %p290 = por %p288, %p289
      %p291 = scmp.ne.s32.totalorder %s280, %s283
      %p292 = scmp.eq.s32.totalorder %s29, 1
      %p293 = por %p291, %p292
      %p294 = scmp.ne.s32.totalorder %s283, %s284
      %p295 = scmp.eq.s32.totalorder %s29, 0
      %p296 = por %p294, %p295
      %p297 = scmp.ne.s32.totalorder %s283, %s284
      %p298 = scmp.eq.s32.totalorder %s30, 1
      %p299 = por %p297, %p298
      %p301 = scmp.ne.s32.totalorder %s284, %s300
      %p302 = scmp.eq.s32.totalorder %s30, 0
      %p303 = por %p301, %p302
      %p304 = scmp.le.s32.totalorder 1, %s24
      %p305 = scmp.lt.s32.totalorder %s24, 3
      %p306 = pnand %p304, %p305
      %p307 = pneg %p306
      // Predicated region
      $region9: #{tpu_custom_call.1} parent=5 // pred_check
        _
      $region10: #{tpu_custom_call.1} parent=5 // pred_check_branch
        %309 = sbr.rel (%p306) target = $region12
      $region11: #{tpu_custom_call.1} parent=5 // pred_region
        %s310 = ssub.s32 %s24, 1
        // Predicated region
        $region13: #{tpu_custom_call.1} parent=11 // pred_check
          %p311 = pneg %p45
        $region14: #{tpu_custom_call.1} parent=11 // pred_check_branch
          %313 = sbr.rel (%p311) target = $region16
        $region15: #{tpu_custom_call.1} parent=11 // pred_region
          _
        $region16: #{tpu_custom_call.1} parent=11 // pred_fallthru
          _
        // Predicated region
        $region17: #{tpu_custom_call.1} parent=11 // pred_check
          %p314 = pneg %p118
        $region18: #{tpu_custom_call.1} parent=11 // pred_check_branch
          %316 = sbr.rel (%p314) target = $region20
        $region19: #{tpu_custom_call.1} parent=11 // pred_region
          _
        $region20: #{tpu_custom_call.1} parent=11 // pred_fallthru
          _
        // Predicated region
        $region21: #{tpu_custom_call.1} parent=11 // pred_check
          %p317 = pneg %p139
        $region22: #{tpu_custom_call.1} parent=11 // pred_check_branch
          %319 = sbr.rel (%p317) target = $region24
        $region23: #{tpu_custom_call.1} parent=11 // pred_region
          _
        $region24: #{tpu_custom_call.1} parent=11 // pred_fallthru
          _
        // Predicated region
        $region25: #{tpu_custom_call.1} parent=11 // pred_check
          %p320 = pneg %p160
        $region26: #{tpu_custom_call.1} parent=11 // pred_check_branch
          %322 = sbr.rel (%p320) target = $region28
        $region27: #{tpu_custom_call.1} parent=11 // pred_region
          _
        $region28: #{tpu_custom_call.1} parent=11 // pred_fallthru
          _
        // Predicated region
        $region29: #{tpu_custom_call.1} parent=11 // pred_check
          %p323 = pneg %p181
        $region30: #{tpu_custom_call.1} parent=11 // pred_check_branch
          %325 = sbr.rel (%p323) target = $region32
        $region31: #{tpu_custom_call.1} parent=11 // pred_region
          _
        $region32: #{tpu_custom_call.1} parent=11 // pred_fallthru
          _
        // Predicated region
        $region33: #{tpu_custom_call.1} parent=11 // pred_check
          %p326 = pneg %p202
        $region34: #{tpu_custom_call.1} parent=11 // pred_check_branch
          %328 = sbr.rel (%p326) target = $region36
        $region35: #{tpu_custom_call.1} parent=11 // pred_region
          _
        $region36: #{tpu_custom_call.1} parent=11 // pred_fallthru
          _
        // Predicated region
        $region37: #{tpu_custom_call.1} parent=11 // pred_check
          %p329 = pneg %p223
        $region38: #{tpu_custom_call.1} parent=11 // pred_check_branch
          %331 = sbr.rel (%p329) target = $region40
        $region39: #{tpu_custom_call.1} parent=11 // pred_region
          _
        $region40: #{tpu_custom_call.1} parent=11 // pred_fallthru
          _
        // Predicated region
        $region41: #{tpu_custom_call.1} parent=11 // pred_check
          %p332 = pneg %p244
        $region42: #{tpu_custom_call.1} parent=11 // pred_check_branch
          %334 = sbr.rel (%p332) target = $region44
        $region43: #{tpu_custom_call.1} parent=11 // pred_region
          _
        $region44: #{tpu_custom_call.1} parent=11 // pred_fallthru
          _
      $region12: #{tpu_custom_call.1} parent=5 // pred_fallthru
        _
      %p335 = scmp.lt.s32.totalorder %s24, 2
      // Predicated region
      $region45: #{tpu_custom_call.1} parent=5 // pred_check
        %p336 = pneg %p335
      $region46: #{tpu_custom_call.1} parent=5 // pred_check_branch
        %338 = sbr.rel (%p336) target = $region48
      $region47: #{tpu_custom_call.1} parent=5 // pred_region
        // Predicated region
        $region49: #{tpu_custom_call.1} parent=47 // pred_check
          %p339 = pneg %p65
        $region50: #{tpu_custom_call.1} parent=47 // pred_check_branch
          %341 = sbr.rel (%p339) target = $region52
        $region51: #{tpu_custom_call.1} parent=47 // pred_region
          %s342 = smul.u32 2, %s24
          %p343 = scmp.lt.s32.totalorder %s342, 3
          %s344 = scalar_select %p343, %s342, 3
          %s345 = smul.addr %s344, 4
          %s346 = scalar_lea.vmem %s1, %s345
          %s347 = smul.u32 2, %s24
        $region52: #{tpu_custom_call.1} parent=47 // pred_fallthru
          _
        // Predicated region
        $region53: #{tpu_custom_call.1} parent=47 // pred_check
          %p348 = pneg %p91
        $region54: #{tpu_custom_call.1} parent=47 // pred_check_branch
          %350 = sbr.rel (%p348) target = $region56
        $region55: #{tpu_custom_call.1} parent=47 // pred_region
          %s351 = smul.u32 2, %s24
          %p352 = scmp.lt.s32.totalorder %s351, 3
          %s353 = scalar_select %p352, %s351, 3
          %s354 = smul.addr %s353, 4
          %s355 = scalar_lea.vmem %s2, %s354
          %s356 = smul.u32 2, %s24
        $region56: #{tpu_custom_call.1} parent=47 // pred_fallthru
          _
      $region48: #{tpu_custom_call.1} parent=5 // pred_fallthru
        _
      %p357 = scmp.le.s32.totalorder 1, %s24
      %p358 = scmp.lt.s32.totalorder %s24, 3
      %p359 = pnand %p357, %p358
      %p360 = pneg %p359
      // Predicated region
      $region57: #{tpu_custom_call.1} parent=5 // pred_check
        _
      $region58: #{tpu_custom_call.1} parent=5 // pred_check_branch
        %362 = sbr.rel (%p359) target = $region60
      $region59: #{tpu_custom_call.1} parent=5 // pred_region
        %s363 = ssub.s32 %s24, 1
        %p364 = pneg %p45
        %p365 = pneg %p42
        %s366 = smul.u32 2, %s29
        %p367 = scmp.lt.s32.totalorder %s366, 3
        %s368 = scalar_select %p367, %s366, 3
        %s369 = smul.addr %s368, 4
        %s370 = scalar_lea.vmem %s1, %s369
        %p371 = pneg %p71
        %p372 = pneg %p68
        %s373 = smul.u32 2, %s29
        %p374 = scmp.lt.s32.totalorder %s373, 3
        %s375 = scalar_select %p374, %s373, 3
        %s376 = smul.addr %s375, 4
        %s377 = scalar_lea.vmem %s2, %s376
        %p378 = pneg %p97
        %p379 = pneg %p94
        %p380 = pneg %p118
        %p381 = pneg %p115
        %p382 = pneg %p139
        %p383 = pneg %p136
        %p384 = pneg %p160
        %p385 = pneg %p157
        %p386 = pneg %p181
        %p387 = pneg %p178
        %p388 = pneg %p202
        %p389 = pneg %p199
        %p390 = pneg %p223
        %p391 = pneg %p220
        %p392 = pneg %p244
        %p393 = pneg %p241
        %p394 = pneg %p270
        %p395 = pneg %p267
        %s396 = sand.u32 %s257, 1
        %s397 = scalar_lea.sflag [#allocation3], %s396
        %s398 = sand.u32 %s257, 1
        %s399 = smul.addr %s398, 8
        %s400 = scalar_lea.vmem [#allocation2], %s399
        %p401 = pneg %p296
        %p402 = pneg %p293
        %s403 = sand.u32 %s283, 1
        %s404 = scalar_lea.sflag [#allocation5], %s403
        %s405 = sand.u32 %s283, 1
        %s406 = smul.addr %s405, 8
        %s407 = scalar_lea.vmem [#allocation4], %s406
        %s408 = smul.u32 2, %s29
        %p409 = scmp.lt.s32.totalorder %s408, 3
        %s410 = scalar_select %p409, %s408, 3
        %s411 = smul.addr %s410, 4
        %s412 = scalar_lea.vmem %s1, %s411
        %s413 = smul.u32 2, %s29
        %s414 = smul.u32 2, %s29
        %p415 = scmp.lt.s32.totalorder %s414, 3
        %s416 = scalar_select %p415, %s414, 3
        %s417 = smul.addr %s416, 4
        %s418 = scalar_lea.vmem %s2, %s417
        %s419 = smul.u32 2, %s29
        %s420 = smul.u32 2, %s29
        %s421 = smul.u32 2, %s29
        %s423 = smul.u32 %s29, 16
        %v424 = vld [vmem:[%s0] sm:$0xf]
        %v425 = vld [vmem:[%s0 + $0x4] sm:$0xf]
        %v426 = vld [vmem:[%s0 + $0x8] sm:$0xf]
        %v427 = vld [vmem:[%s0 + $0xc] sm:$0xf]
        %v428 = vld [vmem:[%s6] sm:$0xf]
        %v433 = vunpack.c.l.b16 %v424
        %v434 = vunpack.c.l.b16 %v425
        %v435 = vunpack.c.l.b16 %v426
        %v436 = vunpack.c.l.b16 %v427
        %v437 = vpack.c.b16 %v434, %v433
        %v438 = vpack.c.b16 %v436, %v435
        %vm439 = vcmask 64512
        %v441 = vsel %vm439, %v437, 0
        %v444 = vsel %vm439, %v438, 0
        %vm446 = vcmask 1043456
        %v448 = vsel %vm446, %v428, 0
        %450 = vmatpush.bf16.msra.mxu0 0
        %451 = vmatpush.bf16.msra.mxu0 0
        %452 = vmatpush.bf16.msra.mxu0 0
        %453 = vmatpush.bf16.msra.mxu0 0
        %454 = vmatpush.bf16.msra.mxu0 0
        %455 = vmatpush.bf16.msra.mxu0 0
        %456 = vmatpush.bf16.msra.mxu0 0
        %457 = vmatpush.bf16.msra.mxu0 %v448
        %458 = vmatmul.bf16.gmra.mxu0 %v441
        %v459 = vpop.f32.mrf.mxu0
        %v460 = vadd.f32 0.0, %v459
        %v461 = vpop.f32.mrf.mxu0
        %v462 = vadd.f32 0.0, %v461
        %463 = vmatmul.bf16.gmra.mxu0 %v444
        %v464 = vpop.f32.mrf.mxu0
        %v465 = vadd.f32 0.0, %v464
        %v466 = vpop.f32.mrf.mxu0
        %v467 = vadd.f32 0.0, %v466
        %468 = vdwg.mxu0
        %v469 = vld [vmem:[%s8] sm:$0x1]
        %v471 = vsel %vm439, %v469, 0
        %473 = vmatpush.bf16.xpose.msra.mxu0 0
        %474 = vmatpush.bf16.xpose.msra.mxu0 0
        %475 = vmatpush.bf16.xpose.msra.mxu0 0
        %476 = vmatpush.bf16.xpose.msra.mxu0 0
        %477 = vmatpush.bf16.xpose.msra.mxu0 0
        %478 = vmatpush.bf16.xpose.msra.mxu0 0
        %479 = vmatpush.bf16.xpose.msra.mxu0 %v444
        %480 = vmatpush.bf16.xpose.msra.mxu0 %v441
        %481 = vmatmul.bf16.gmra.mxu0 %v471
        %v482 = vpop.f32.mrf.mxu0
        %v483 = vadd.f32 0.0, %v482
        %v484 = vpop.f32.mrf.mxu0
        %485 = vdwg.mxu0
        %s486 = sshra.s32 %s423, 3
        %s487 = sand.u32 %s423, 7
        %s488 = smul.addr %s486, 4
        %s489 = scalar_lea.vmem %s0, %s488
        %v490 = vld [vmem:[%s489] sm:$0xf]
        %v491 = vld [vmem:[%s489 + $0x4] sm:$0xf]
        %v492 = vunpack.c.l.bf16 %v490
        %v493 = vunpack.c.l.bf16 %v491
        %v494 = vld [vmem:[%s9] sm:$0x1]
        %v495 = vunpack.c.l.bf16 %v494
        %v496 = vperm.slane %v495, 0
        %v497 = vmul.f32 %v492, %v496
        %v498 = vmul.f32 %v493, %v496
        %v499 = vsel %vm439, %v497, 0.0
        %500 = vadd.xlane.f32.xlu0 %v499
        %v501 = vpop.xlane.xlu0 %500
        %v502 = vsel %vm439, %v498, 0.0
        %503 = vadd.xlane.f32.xlu0 %v502
        %v504 = vpop.xlane.xlu0 %503
        %v505 = vperm.slane %v483, 0
        %v506 = vadd.f32 %v501, %v505
        %v507 = vadd.f32 %v504, %v505
        %vm508 = vcmp.gt.f32.partialorder %v506, 0.0
        %vm509 = vcmp.gt.f32.partialorder %v507, 0.0
        %v510 = vmul.f32 %v506, 0.2
        %v511 = vmul.f32 %v507, 0.2
        %v512 = vsel %vm508, %v506, %v510
        %v513 = vsel %vm509, %v507, %v511
        %v514 = vld [vmem:[%s412] sm:$0xf]
        %v515 = vld [vmem:[%s412 + $0x4] sm:$0xf]
        %v516 = vunpack.c.l.bf16 %v514
        %v517 = vunpack.c.l.bf16 %v515
        %vm518 = vcmp.gt.f32.partialorder %v516, 0.0
        %vm519 = vcmp.gt.f32.partialorder %v517, 0.0
        %v520 = vsel %vm518, %v512, -1e+30
        %v521 = vsel %vm519, %v513, -1e+30
        %vm522 = vcmask 261120
        %v523 = vsel %vm522, %v520, -inf
        %524 = vmax.xlane.f32.xlu0 %v523
        %v525 = vpop.xlane.xlu0 %524
        %v526 = vsel %vm522, %v521, -inf
        %527 = vmax.xlane.f32.xlu0 %v526
        %v528 = vpop.xlane.xlu0 %527
        %v529 = vsub.f32 %v520, %v525
        %v530 = vsub.f32 %v521, %v528
        %v531 = vmul.f32 %v529, 1.442695
        %v532 = vpow.pop %v531
        %v533 = vmul.f32 %v530, 1.442695
        %v534 = vpow.pop %v533
        %v535 = vsel %vm522, %v532, 0.0
        %536 = vadd.xlane.f32.xlu0 %v535
        %v537 = vpop.xlane.xlu0 %536
        %v538 = vsel %vm522, %v534, 0.0
        %539 = vadd.xlane.f32.xlu0 %v538
        %v540 = vpop.xlane.xlu0 %539
        %v541 = vpack.c.bf16 %v534, %v532
        %v542 = vpack.c.bf16 %v462, %v460
        %v543 = vpack.c.bf16 %v467, %v465
        %v545 = vsel %vm522, %v541, 0
        %547 = vmatpush.bf16.msra.mxu0 0
        %548 = vmatpush.bf16.msra.mxu0 0
        %549 = vmatpush.bf16.msra.mxu0 0
        %550 = vmatpush.bf16.msra.mxu0 0
        %551 = vmatpush.bf16.msra.mxu0 0
        %552 = vmatpush.bf16.msra.mxu0 0
        %553 = vmatpush.bf16.msra.mxu0 %v543
        %554 = vmatpush.bf16.msra.mxu0 %v542
        %555 = vmatmul.bf16.gmra.mxu0 %v545
        %v556 = vpop.f32.mrf.mxu0
        %v557 = vadd.f32 0.0, %v556
        %v558 = vpop.f32.mrf.mxu0
        %v559 = vadd.f32 0.0, %v558
        %560 = vdwg.mxu0
        %v561 = vrcp.pop %v537
        %v562 = vrcp.pop %v540
        %v563 = vmul.f32 %v557, %v561
        %v564 = vmul.f32 %v559, %v562
        %v565 = vld [vmem:[%s7] sm:$0x1]
        %v567 = vperm.slane %v565, 0
        %v569 = vadd.f32 %v563, %v567
        %v570 = vadd.f32 %v564, %v567
        %v571 = vpack.c.bf16 %v569, %v569
        %v572 = vpack.c.bf16 %v570, %v570
        %573 = vst [vmem:[%s400] sm:$0xf] %v571
        %574 = vst [vmem:[%s400 + $0x4] sm:$0xf] %v572
        %v575 = vld [vmem:[%s3] sm:$0xf]
        %v576 = vld [vmem:[%s4] sm:$0xf]
        %v577 = vld [vmem:[%s4 + $0x4] sm:$0xf]
        %v578 = vld [vmem:[%s4 + $0x8] sm:$0xf]
        %v579 = vld [vmem:[%s4 + $0xc] sm:$0xf]
        %v584 = vunpack.c.l.b16 %v576
        %v585 = vunpack.c.l.b16 %v577
        %v586 = vunpack.c.l.b16 %v578
        %v587 = vunpack.c.l.b16 %v579
        %v588 = vpack.c.b16 %v585, %v584
        %v589 = vpack.c.b16 %v587, %v586
        %v593 = vsel %vm522, %v575, 0
        %595 = vmatpush.bf16.msra.mxu0 0
        %596 = vmatpush.bf16.msra.mxu0 0
        %597 = vmatpush.bf16.msra.mxu0 0
        %598 = vmatpush.bf16.msra.mxu0 0
        %599 = vmatpush.bf16.msra.mxu0 0
        %600 = vmatpush.bf16.msra.mxu0 0
        %601 = vmatpush.bf16.msra.mxu0 %v589
        %602 = vmatpush.bf16.msra.mxu0 %v588
        %603 = vmatmul.bf16.gmra.mxu0 %v593
        %v604 = vpop.f32.mrf.mxu0
        %v605 = vadd.f32 0.0, %v604
        %v606 = vpop.f32.mrf.mxu0
        %607 = vdwg.mxu0
        %v608 = vpack.c.bf16 %v605, %v605
        %v609 = vld [vmem:[%s5] sm:$0xf]
        %v611 = vsel %vm439, %v608, 0
        %v614 = vsel %vm446, %v609, 0
        %616 = vmatpush.bf16.msra.mxu0 0
        %617 = vmatpush.bf16.msra.mxu0 0
        %618 = vmatpush.bf16.msra.mxu0 0
        %619 = vmatpush.bf16.msra.mxu0 0
        %620 = vmatpush.bf16.msra.mxu0 0
        %621 = vmatpush.bf16.msra.mxu0 0
        %622 = vmatpush.bf16.msra.mxu0 0
        %623 = vmatpush.bf16.msra.mxu0 %v614
        %624 = vmatmul.bf16.gmra.mxu0 %v611
        %v625 = vpop.f32.mrf.mxu0
        %v626 = vadd.f32 0.0, %v625
        %v627 = vpop.f32.mrf.mxu0
        %628 = vdwg.mxu0
        %v629 = vld [vmem:[%s418] sm:$0xf]
        %v630 = vld [vmem:[%s418 + $0x4] sm:$0xf]
        %v631 = vpack.c.bf16 %v626, %v626
        %v634 = vunpack.c.l.b16 %v629
        %v635 = vunpack.c.l.b16 %v630
        %v636 = vpack.c.b16 %v635, %v634
        %v638 = vsel %vm439, %v636, 0
        %v641 = vsel %vm446, %v631, 0
        %643 = vmatpush.bf16.msra.mxu0 0
        %644 = vmatpush.bf16.msra.mxu0 0
        %645 = vmatpush.bf16.msra.mxu0 0
        %646 = vmatpush.bf16.msra.mxu0 0
        %647 = vmatpush.bf16.msra.mxu0 0
        %648 = vmatpush.bf16.msra.mxu0 0
        %649 = vmatpush.bf16.msra.mxu0 0
        %650 = vmatpush.bf16.msra.mxu0 %v641
        %651 = vmatmul.bf16.gmra.mxu0 %v638
        %v652 = vpop.f32.mrf.mxu0
        %v653 = vadd.f32 0.0, %v652
        %v654 = vpop.f32.mrf.mxu0
        %v655 = vadd.f32 0.0, %v654
        %656 = vdwg.mxu0
        %v657 = vadd.f32 %v569, %v653
        %v658 = vadd.f32 %v570, %v655
        %v659 = vmax.f32 %v657, 0.0
        %v660 = vmax.f32 %v658, 0.0
        %v661 = vpack.c.bf16 %v659, %v659
        %v662 = vpack.c.bf16 %v660, %v660
        %663 = vst [vmem:[%s407] sm:$0xf] %v661
        %664 = vst [vmem:[%s407 + $0x4] sm:$0xf] %v662
        %s665 = sand.u32 %s257, 1
        %s666 = scalar_lea.sflag [#allocation3], %s665
        %s667 = sand.u32 %s257, 1
        %s668 = smul.addr %s667, 8
        %s669 = scalar_lea.vmem [#allocation2], %s668
        %s670 = sand.u32 %s283, 1
        %s671 = scalar_lea.sflag [#allocation5], %s670
        %s672 = sand.u32 %s283, 1
        %s673 = smul.addr %s672, 8
        %s674 = scalar_lea.vmem [#allocation4], %s673
        // Predicated region
        $region61: #{tpu_custom_call.1} parent=59 // pred_check
          %p675 = pneg %p267
        $region62: #{tpu_custom_call.1} parent=59 // pred_check_branch
          %677 = sbr.rel (%p675) target = $region64
        $region63: #{tpu_custom_call.1} parent=59 // pred_region
          %s678 = smul.u32 2, %s29
          %680 = vsyncadd %s666, 0
          %s681 = smul.addr %s678, 4
          %s682 = scalar_lea.hbm %s10, %s681
          %s683 = sshll.u32 %s669, 4
          %s684 = int_to_ptr.vmem [resolvable:$true] %s683
          %s685 = sshll.u32 %s682, 4
          %s686 = int_to_ptr.hbm [resolvable:$true] %s685
          %691 = dma.vmem_to_hbm [thread:$0]  %s684, 128, %s686, %s666, 64, 64, 4
        $region64: #{tpu_custom_call.1} parent=59 // pred_fallthru
          _
        // Predicated region
        $region65: #{tpu_custom_call.1} parent=59 // pred_check
          %p692 = pneg %p293
        $region66: #{tpu_custom_call.1} parent=59 // pred_check_branch
          %694 = sbr.rel (%p692) target = $region68
        $region67: #{tpu_custom_call.1} parent=59 // pred_region
          %s695 = smul.u32 2, %s29
          %697 = vsyncadd %s671, 0
          %s698 = smul.addr %s695, 4
          %s699 = scalar_lea.hbm %s11, %s698
          %s700 = sshll.u32 %s674, 4
          %s701 = int_to_ptr.vmem [resolvable:$true] %s700
          %s702 = sshll.u32 %s699, 4
          %s703 = int_to_ptr.hbm [resolvable:$true] %s702
          %708 = dma.vmem_to_hbm [thread:$0]  %s701, 128, %s703, %s671, 64, 64, 4
        $region68: #{tpu_custom_call.1} parent=59 // pred_fallthru
          _
      $region60: #{tpu_custom_call.1} parent=5 // pred_fallthru
        _
      %p709 = scmp.le.s32.totalorder 2, %s24
      // Predicated region
      $region69: #{tpu_custom_call.1} parent=5 // pred_check
        %p710 = pneg %p709
      $region70: #{tpu_custom_call.1} parent=5 // pred_check_branch
        %712 = sbr.rel (%p710) target = $region72
      $region71: #{tpu_custom_call.1} parent=5 // pred_region
        %s713 = ssub.s32 %s24, 2
        // Predicated region
        $region73: #{tpu_custom_call.1} parent=71 // pred_check
          %p714 = pneg %p273
        $region74: #{tpu_custom_call.1} parent=71 // pred_check_branch
          %716 = sbr.rel (%p714) target = $region76
        $region75: #{tpu_custom_call.1} parent=71 // pred_region
          %s717 = sand.u32 %s258, 1
          %s718 = scalar_lea.sflag [#allocation3], %s717
          %s719 = sand.u32 %s258, 1
          %s720 = smul.addr %s719, 8
          %s721 = scalar_lea.vmem [#allocation2], %s720
          %723 = dma.done %s718, 128
        $region76: #{tpu_custom_call.1} parent=71 // pred_fallthru
          _
        // Predicated region
        $region77: #{tpu_custom_call.1} parent=71 // pred_check
          %p724 = pneg %p299
        $region78: #{tpu_custom_call.1} parent=71 // pred_check_branch
          %726 = sbr.rel (%p724) target = $region80
        $region79: #{tpu_custom_call.1} parent=71 // pred_region
          %s727 = sand.u32 %s284, 1
          %s728 = scalar_lea.sflag [#allocation5], %s727
          %s729 = sand.u32 %s284, 1
          %s730 = smul.addr %s729, 8
          %s731 = scalar_lea.vmem [#allocation4], %s730
          %733 = dma.done %s728, 128
        $region80: #{tpu_custom_call.1} parent=71 // pred_fallthru
          _
      $region72: #{tpu_custom_call.1} parent=5 // pred_fallthru
        _
    $region6: #{tpu_custom_call.1} parent=1 // loop_footer
      %s28 = sadd.s32 1, %s24
    $region7: #{tpu_custom_call.1} parent=1 // loop_footer_branch
      %23 = sbr.rel target = $region3
    $region8: #{tpu_custom_call.1} parent=1 // loop_exit
      _
    %734 = vsyncpa [#allocation3], 1
    %s735 = scalar_lea.sflag [#allocation3], 1
    %736 = vsyncpa %s735, 1
    %737 = vsyncpa [#allocation5], 1
    %s738 = scalar_lea.sflag [#allocation5], 1
    %739 = vsyncpa %s738, 1

</llo_original>
